<compile_context>
chip_gen: v6e
topology: v6e:2x2x1
jax: 0.10.0
libtpu: 0.0.40
codegen_flags: <defaults>
</compile_context>

<pallas_src>
import functools

import jax
import jax.numpy as jnp
from jax.experimental import pallas as pl
from jax.experimental.pallas import tpu as pltpu

EMBED_DIM = 32
NUM_REVISIT_CLASSES = 5
_PACK_ROWS = 16  # padded row/col count for the packed small-weight slab


def _context_kernel(cur_node_ref, emb_ref, sel_ref, w_emb_ref, w_small_ref,
                    o_ref, *, num_nodes):
    B = o_ref.shape[0]
    BN = emb_ref.shape[0]

    # ---- 1) one-hot gather of the current-node embedding on the MXU --------
    col = jax.lax.broadcasted_iota(jnp.int32, (B, BN), 1)        # flat column id
    row = jax.lax.broadcasted_iota(jnp.int32, (B, BN), 0)        # batch row id
    target = row * num_nodes + cur_node_ref[...]                 # [B,1] bcast -> [B,BN]
    onehot = (col == target).astype(jnp.float32)                 # [B, B*N]
    cur = jnp.dot(onehot, emb_ref[...],
                  preferred_element_type=jnp.float32)            # [B, D]

    # ---- 2) dense projection of the current-node embedding (MXU) -----------
    out = jnp.dot(cur, w_emb_ref[...], preferred_element_type=jnp.float32)

    # ---- 3) state + one-hot features + bias as one small MXU matmul --------
    out = out + jnp.dot(sel_ref[...], w_small_ref[...],
                        preferred_element_type=jnp.float32)      # [B,16]@[16,D]

    o_ref[...] = out


def pack_params(weight, bias, num_revisit=NUM_REVISIT_CLASSES):
    """One-time parameter packing (hoisted out of the per-call hot path).

    weight: [embed_dim, embed_dim + num_revisit + 5]  (torch nn.Linear layout)
    bias:   [embed_dim]
    Returns (w_emb [D, D], w_small [16, D]) with w_small rows:
      [state, revisit_0..C-1, backtrack_0..1, infeasible_0..1, bias, zero-pad].
    """
    d = bias.shape[0]
    c = num_revisit
    wt = weight.T.astype(jnp.float32)                            # [D_in, D]
    w_emb = wt[:d]                                               # [D, D]
    rows = jnp.concatenate([
        wt[d:d + 1],                                             # state
        wt[d + 1:d + 1 + c],                                     # revisit one-hot
        wt[d + 1 + c:d + 3 + c],                                 # backtrack one-hot
        wt[d + 3 + c:d + 5 + c],                                 # infeasible one-hot
        bias.astype(jnp.float32)[None, :],                       # bias
    ], axis=0)                                                   # [c + 6, D]
    pad = jnp.zeros((_PACK_ROWS - rows.shape[0], d), jnp.float32)
    return w_emb, jnp.concatenate([rows, pad], axis=0)           # [16, D]


def _pack_features(td, num_revisit):
    """Build the [B, 16] selection operand matching pack_params row order.

    Columns: [curr_time/tw_end0, one-hot revisit (C), one-hot backtrack (2),
              one-hot infeasible (2), 1.0 (bias), zero pad].
    """
    curr_time = td["current_time"].astype(jnp.float32)
    tw_end0 = td["time_windows"][:, 0, 1].astype(jnp.float32)
    state = (curr_time / tw_end0)[:, None]                       # [B, 1]
    rc = jnp.take_along_axis(td["revisit_count_stack"],
                             td["step_idx"].astype(jnp.int32)[:, None],
                             axis=-1)[:, 0]
    oh_r = jax.nn.one_hot(jnp.clip(rc, 0, num_revisit - 1), num_revisit,
                          dtype=jnp.float32)
    oh_b = jax.nn.one_hot(
        jnp.clip(td["backtrack_budget_reached"].astype(jnp.int32), 0, 1), 2,
        dtype=jnp.float32)
    oh_c = jax.nn.one_hot(
        jnp.clip(td["confirmed_infeasible"].astype(jnp.int32), 0, 1), 2,
        dtype=jnp.float32)
    ones = jnp.ones_like(state)
    sel = jnp.concatenate([state, oh_r, oh_b, oh_c, ones], axis=-1)
    pad = jnp.zeros((sel.shape[0], _PACK_ROWS - sel.shape[1]), jnp.float32)
    return jnp.concatenate([sel, pad], axis=-1)                  # [B, 16]


@functools.partial(jax.jit, static_argnames=("num_revisit",))
def tsptw_rie_context(embeddings, td, w_emb, w_small,
                      num_revisit=NUM_REVISIT_CLASSES):
    B, N, D = embeddings.shape
    sel = _pack_features(td, num_revisit)                        # [B, 16]
    cur_node = td["current_node"].astype(jnp.int32)[:, None]     # [B, 1]
    emb_flat = embeddings.reshape(B * N, D).astype(jnp.float32)  # metadata-only reshape

    flops = 2 * B * (B * N) * D + 2 * B * D * D + 2 * B * _PACK_ROWS * D
    bytes_accessed = 4 * (B * N * D + B * _PACK_ROWS + D * D
                          + _PACK_ROWS * D + 2 * B * D)

    kernel = functools.partial(_context_kernel, num_nodes=N)
    return pl.pallas_call(
        kernel,
        out_shape=jax.ShapeDtypeStruct((B, D), jnp.float32),
        in_specs=[
            pl.BlockSpec(memory_space=pltpu.MemorySpace.VMEM),   # current_node [B,1]
            pl.BlockSpec(memory_space=pltpu.MemorySpace.VMEM),   # embeddings [B*N,D]
            pl.BlockSpec(memory_space=pltpu.MemorySpace.VMEM),   # sel features [B,16]
            pl.BlockSpec(memory_space=pltpu.MemorySpace.VMEM),   # w_emb [D,D]
            pl.BlockSpec(memory_space=pltpu.MemorySpace.VMEM),   # w_small [16,D]
        ],
        out_specs=pl.BlockSpec(memory_space=pltpu.MemorySpace.VMEM),
        cost_estimate=pl.CostEstimate(flops=flops, transcendentals=0,
                                      bytes_accessed=bytes_accessed),
    )(cur_node, emb_flat, sel, w_emb, w_small)


def _reference(embeddings, td, weight, bias):
    B, N, D = embeddings.shape
    C = NUM_REVISIT_CLASSES
    cur = embeddings[jnp.arange(B), td["current_node"].astype(jnp.int32)]
    state = td["current_time"].astype(jnp.float32)[:, None] / \
        td["time_windows"][:, 0, 1:].astype(jnp.float32)
    rc = jnp.take_along_axis(td["revisit_count_stack"],
                             td["step_idx"].astype(jnp.int32)[:, None],
                             axis=-1)[:, 0]
    oh_r = jax.nn.one_hot(jnp.clip(rc, 0, C - 1), C, dtype=jnp.float32)
    oh_b = jax.nn.one_hot(
        jnp.clip(td["backtrack_budget_reached"].astype(jnp.int32), 0, 1), 2,
        dtype=jnp.float32)
    oh_c = jax.nn.one_hot(
        jnp.clip(td["confirmed_infeasible"].astype(jnp.int32), 0, 1), 2,
        dtype=jnp.float32)
    ctx = jnp.concatenate([cur, state, oh_r, oh_b, oh_c], axis=-1)
    return ctx @ weight.T + bias


if __name__ == "__main__":
    B, N, T = 8, 10, 6
    D, C = EMBED_DIM, NUM_REVISIT_CLASSES
    D_in = D + C + 5

    key = jax.random.PRNGKey(0)
    keys = jax.random.split(key, 12)

    embeddings = jax.random.normal(keys[0], (B, N, D), jnp.float32)
    tw_start = jax.random.uniform(keys[1], (B, N, 1), jnp.float32, 0.0, 5.0)
    tw_end = tw_start + jax.random.uniform(keys[2], (B, N, 1), jnp.float32, 1.0, 3.0)
    td = {
        "current_node": jax.random.randint(keys[3], (B,), 0, N),
        "current_time": jax.random.uniform(keys[4], (B,), jnp.float32, 0.0, 5.0),
        "time_windows": jnp.concatenate([tw_start, tw_end], axis=-1),      # [B,N,2]
        "revisit_count_stack": jax.random.randint(keys[5], (B, T), 0, 8),  # exercises clamp
        "step_idx": jax.random.randint(keys[6], (B,), 0, T),
        "backtrack_budget_reached": jax.random.bernoulli(keys[7], 0.5, (B,)),
        "confirmed_infeasible": jax.random.bernoulli(keys[8], 0.5, (B,)),
    }

    # deterministic nn.Linear(step_context_dim, embed_dim, bias=True) params
    bound = 1.0 / (D_in ** 0.5)
    weight = jax.random.uniform(keys[9], (D, D_in), jnp.float32, -bound, bound)
    bias = jax.random.uniform(keys[10], (D,), jnp.float32, -bound, bound)

    # one-time parameter packing (outside the per-call hot path)
    w_emb, w_small = pack_params(weight, bias)

    out = tsptw_rie_context(embeddings, td, w_emb, w_small)
    out = jax.block_until_ready(out)

    ref = _reference(embeddings, td, weight, bias)
    assert out.shape == (B, D)
    assert jnp.allclose(out, ref, rtol=1e-5, atol=1e-5), "mismatch vs reference"
    print("KERNEL_OK")
</pallas_src>

<mosaic_0001>
module attributes {stable_mosaic.version = 11 : i64} {
  func.func @_context_kernel(%arg0: memref<8x1xi32, #tpu.memory_space<vmem>>, %arg1: memref<80x32xf32, #tpu.memory_space<vmem>>, %arg2: memref<8x16xf32, #tpu.memory_space<vmem>>, %arg3: memref<32x32xf32, #tpu.memory_space<vmem>>, %arg4: memref<16x32xf32, #tpu.memory_space<vmem>>, %arg5: memref<8x32xf32, #tpu.memory_space<vmem>>) attributes {dimension_semantics = [], scalar_prefetch = 0 : i64, scratch_operands = 0 : i64, tpu.core_type = #tpu.core_type<tc>} {
    %0 = tpu.iota {dimensions = array<i32: 1>} : vector<8x80xi32>
    %1 = tpu.iota {dimensions = array<i32: 0>} : vector<8x80xi32>
    %c10_i32 = arith.constant 10 : i32
    %2 = vector.broadcast %c10_i32 : i32 to vector<8x80xi32>
    %3 = arith.muli %1, %2 : vector<8x80xi32>
    %c0 = arith.constant 0 : index
    %c0_0 = arith.constant 0 : index
    %4 = vector.load %arg0[%c0, %c0_0] : memref<8x1xi32, #tpu.memory_space<vmem>>, vector<8x1xi32>
    %5 = vector.broadcast %4 : vector<8x1xi32> to vector<8x80xi32>
    %6 = arith.addi %3, %5 : vector<8x80xi32>
    %7 = arith.cmpi eq, %0, %6 : vector<8x80xi32>
    %8 = arith.extui %7 : vector<8x80xi1> to vector<8x80xi32>
    %9 = arith.sitofp %8 : vector<8x80xi32> to vector<8x80xf32>
    %c0_1 = arith.constant 0 : index
    %c0_2 = arith.constant 0 : index
    %10 = vector.load %arg1[%c0_1, %c0_2] : memref<80x32xf32, #tpu.memory_space<vmem>>, vector<80x32xf32>
    %cst = arith.constant dense<0.000000e+00> : vector<8x32xf32>
    %11 = tpu.matmul %9, %10, %cst {dimension_numbers = #tpu.dot_dimension_numbers<[1], [0], [0], [1], [0, 0, 1, 1], [], []>} : vector<8x80xf32>, vector<80x32xf32>, vector<8x32xf32> -> vector<8x32xf32>
    %c0_3 = arith.constant 0 : index
    %c0_4 = arith.constant 0 : index
    %12 = vector.load %arg3[%c0_3, %c0_4] : memref<32x32xf32, #tpu.memory_space<vmem>>, vector<32x32xf32>
    %cst_5 = arith.constant dense<0.000000e+00> : vector<8x32xf32>
    %13 = tpu.matmul %11, %12, %cst_5 {dimension_numbers = #tpu.dot_dimension_numbers<[1], [0], [0], [1], [0, 0, 1, 1], [], []>} : vector<8x32xf32>, vector<32x32xf32>, vector<8x32xf32> -> vector<8x32xf32>
    %c0_6 = arith.constant 0 : index
    %c0_7 = arith.constant 0 : index
    %14 = vector.load %arg2[%c0_6, %c0_7] : memref<8x16xf32, #tpu.memory_space<vmem>>, vector<8x16xf32>
    %c0_8 = arith.constant 0 : index
    %c0_9 = arith.constant 0 : index
    %15 = vector.load %arg4[%c0_8, %c0_9] : memref<16x32xf32, #tpu.memory_space<vmem>>, vector<16x32xf32>
    %cst_10 = arith.constant dense<0.000000e+00> : vector<8x32xf32>
    %16 = tpu.matmul %14, %15, %cst_10 {dimension_numbers = #tpu.dot_dimension_numbers<[1], [0], [0], [1], [0, 0, 1, 1], [], []>} : vector<8x16xf32>, vector<16x32xf32>, vector<8x32xf32> -> vector<8x32xf32>
    %17 = arith.addf %13, %16 : vector<8x32xf32>
    %c0_11 = arith.constant 0 : index
    %c0_12 = arith.constant 0 : index
    %18 = vector.load %arg5[%c0_11, %c0_12] : memref<8x32xf32, #tpu.memory_space<vmem>>, vector<8x32xf32>
    tpu.vector_store %arg5[%c0_11, %c0_12], %17 {strides = array<i32>} : memref<8x32xf32, #tpu.memory_space<vmem>>, vector<8x32xf32>,
    return
  }
}

</mosaic_0001>

<llo_original>
// kernel: tsptw_rie_context.1
$region0: #{tsptw_rie_context.1}
  #allocation0 [shape = 'u32[]', space=smem, size = 0x4, offset = 0x4, fixed_abs, tag = 'smem constant byte address 0x4 - core index']
  #allocation1 [shape = 'u32[144,128]{1,0:T(1,128)}', space=vmem, size = 0x12000, scoped, tag = 'internal scratch']
  %s0 = inlined_call_operand.vmem [shape: s32[8,1], index: 0, kind: input, shape index: {}]
  %s1 = inlined_call_operand.vmem [shape: f32[80,32], index: 1, kind: input, shape index: {}]
  %s2 = inlined_call_operand.vmem [shape: f32[8,16], index: 2, kind: input, shape index: {}]
  %s3 = inlined_call_operand.vmem [shape: f32[32,32], index: 3, kind: input, shape index: {}]
  %s4 = inlined_call_operand.vmem [shape: f32[16,32], index: 4, kind: input, shape index: {}]
  %s5 = inlined_call_operand.hbm [shape: f32[8,32], index: 5, kind: output, shape index: {}]
  %s6 = sld [smem:[#allocation0]]
  $region30: #{tsptw_rie_context.1} parent=0
    _
  %s8 = ssub.s32 1, %s6
  %s9 = scalar_select 0, %s8, %s6
  $region1: #{tsptw_rie_context.1} parent=0
    #allocation2 [shape = 'u8[4096]{0}', space=vmem, size = 0x1000, scoped, tag = 'output window, operand 0, single buffered']
    #allocation3 [shape = 's32[1]{0}', space=sflag, size = 0x4, scoped, tag = 'scoped memory for tsptw_rie_context.1']
    %10 = vsyncpa [#allocation3], 0
    // Predicated region
    $region2: #{tsptw_rie_context.1} parent=1 // pred_check
      _
    $region3: #{tsptw_rie_context.1} parent=1 // pred_check_branch
      %12 = sbr.rel (0) target = $region5
    $region4: #{tsptw_rie_context.1} parent=1 // pred_region
      _
    $region5: #{tsptw_rie_context.1} parent=1 // pred_fallthru
      _
    // Predicated region
    $region6: #{tsptw_rie_context.1} parent=1 // pred_check
      _
    $region7: #{tsptw_rie_context.1} parent=1 // pred_check_branch
      %14 = sbr.rel (0) target = $region9
    $region8: #{tsptw_rie_context.1} parent=1 // pred_region
      _
    $region9: #{tsptw_rie_context.1} parent=1 // pred_fallthru
      _
    // Predicated region
    $region10: #{tsptw_rie_context.1} parent=1 // pred_check
      _
    $region11: #{tsptw_rie_context.1} parent=1 // pred_check_branch
      %16 = sbr.rel (0) target = $region13
    $region12: #{tsptw_rie_context.1} parent=1 // pred_region
      _
    $region13: #{tsptw_rie_context.1} parent=1 // pred_fallthru
      _
    // Predicated region
    $region14: #{tsptw_rie_context.1} parent=1 // pred_check
      _
    $region15: #{tsptw_rie_context.1} parent=1 // pred_check_branch
      %18 = sbr.rel (0) target = $region17
    $region16: #{tsptw_rie_context.1} parent=1 // pred_region
      _
    $region17: #{tsptw_rie_context.1} parent=1 // pred_fallthru
      _
    // Predicated region
    $region18: #{tsptw_rie_context.1} parent=1 // pred_check
      _
    $region19: #{tsptw_rie_context.1} parent=1 // pred_check_branch
      %20 = sbr.rel (0) target = $region21
    $region20: #{tsptw_rie_context.1} parent=1 // pred_region
      _
    $region21: #{tsptw_rie_context.1} parent=1 // pred_fallthru
      _
    %v21 = vlaneseq
    %v22 = vand.u32 %v21, 127
    %v23 = vlaneseq
    %v24 = vshrl.u32 %v23, 7
    %v25 = vmul.u32 %v24, 10
    %v26 = vld [vmem:[%s0] sm:$0xff]
    %27 = vset.pattern.permute.xlu0 0
    %28 = vperm.xlu0 %27, %v26
    %v29 = vpop.permute.xlu0 %28
    %v30 = vadd.s32 %v25, %v29
    %vm31 = vcmp.eq.s32.totalorder %v22, %v30
    %v32 = vsel %vm31, 1, 0
    %v33 = vcvt.s32.f32 %v32
    %v34 = vld [vmem:[%s1] sm:$0xff]
    %v35 = vld [vmem:[%s1 + $0x8] sm:$0xff]
    %v36 = vld [vmem:[%s1 + $0x10] sm:$0xff]
    %v37 = vld [vmem:[%s1 + $0x18] sm:$0xff]
    %v38 = vld [vmem:[%s1 + $0x20] sm:$0xff]
    %v39 = vld [vmem:[%s1 + $0x28] sm:$0xff]
    %v40 = vld [vmem:[%s1 + $0x30] sm:$0xff]
    %v41 = vld [vmem:[%s1 + $0x38] sm:$0xff]
    %v42 = vld [vmem:[%s1 + $0x40] sm:$0xff]
    %v43 = vld [vmem:[%s1 + $0x48] sm:$0xff]
    %vm44 = vcmask 654336
    %v46 = vsel %vm44, %v33, 0
    %48 = vmatprep.subr.mxu0 0.0
    %49 = vmatpush1.msra.mxu0 0.0
    %50 = vmatprep.subr.mxu0 0.0
    %51 = vmatpush1.msra.mxu0 0.0
    %52 = vmatprep.subr.mxu0 0.0
    %53 = vmatpush1.msra.mxu0 0.0
    %54 = vmatprep.subr.mxu0 0.0
    %55 = vmatpush1.msra.mxu0 0.0
    %56 = vmatprep.subr.mxu0 0.0
    %57 = vmatpush1.msra.mxu0 0.0
    %58 = vmatprep.subr.mxu0 0.0
    %59 = vmatpush1.msra.mxu0 0.0
    %60 = vmatprep.subr.mxu0 0.0
    %61 = vmatpush1.msra.mxu0 %v43
    %62 = vmatprep.subr.mxu0 0.0
    %63 = vmatpush1.msra.mxu0 %v42
    %64 = vmatprep.subr.mxu0 0.0
    %65 = vmatpush1.msra.mxu0 %v41
    %66 = vmatprep.subr.mxu0 0.0
    %67 = vmatpush1.msra.mxu0 %v40
    %68 = vmatprep.subr.mxu0 0.0
    %69 = vmatpush1.msra.mxu0 %v39
    %70 = vmatprep.subr.mxu0 0.0
    %71 = vmatpush1.msra.mxu0 %v38
    %72 = vmatprep.subr.mxu0 0.0
    %73 = vmatpush1.msra.mxu0 %v37
    %74 = vmatprep.subr.mxu0 0.0
    %75 = vmatpush1.msra.mxu0 %v36
    %76 = vmatprep.subr.mxu0 0.0
    %77 = vmatpush1.msra.mxu0 %v35
    %78 = vmatprep.subr.mxu0 0.0
    %79 = vmatpush1.msra.mxu0 %v34
    %80 = vmatprep.subr.mxu0 0.0
    %81 = vmatpush2.msra.mxu0 0.0
    %82 = vmatprep.subr.mxu0 0.0
    %83 = vmatpush2.msra.mxu0 0.0
    %84 = vmatprep.subr.mxu0 0.0
    %85 = vmatpush2.msra.mxu0 0.0
    %86 = vmatprep.subr.mxu0 0.0
    %87 = vmatpush2.msra.mxu0 0.0
    %88 = vmatprep.subr.mxu0 0.0
    %89 = vmatpush2.msra.mxu0 0.0
    %90 = vmatprep.subr.mxu0 0.0
    %91 = vmatpush2.msra.mxu0 0.0
    %92 = vmatprep.subr.mxu0 0.0
    %93 = vmatpush2.msra.mxu0 0.0
    %94 = vmatprep.subr.mxu0 0.0
    %95 = vmatpush2.msra.mxu0 0.0
    %96 = vmatprep.subr.mxu0 0.0
    %97 = vmatpush2.msra.mxu0 0.0
    %98 = vmatprep.subr.mxu0 0.0
    %99 = vmatpush2.msra.mxu0 0.0
    %100 = vmatprep.subr.mxu0 0.0
    %101 = vmatpush2.msra.mxu0 0.0
    %102 = vmatprep.subr.mxu0 0.0
    %103 = vmatpush2.msra.mxu0 0.0
    %104 = vmatprep.subr.mxu0 0.0
    %105 = vmatpush2.msra.mxu0 0.0
    %106 = vmatprep.subr.mxu0 0.0
    %107 = vmatpush2.msra.mxu0 0.0
    %108 = vmatprep.subr.mxu0 0.0
    %109 = vmatpush2.msra.mxu0 0.0
    %110 = vmatprep.subr.mxu0 0.0
    %111 = vmatpush2.msra.mxu0 0.0
    %112 = vmatprep.mubr.f32.mxu0 0.0
    %113 = vmatmul.mubr.f32.gmra.mxu0 %v46
    %v114 = vpop.f32.mrf.mxu0
    %v115 = vadd.f32 0.0, %v114
    %v116 = vpop.f32.mrf.mxu0
    %117 = vdwg.mxu0
    %v118 = vld [vmem:[%s3] sm:$0xff]
    %v119 = vld [vmem:[%s3 + $0x8] sm:$0xff]
    %v120 = vld [vmem:[%s3 + $0x10] sm:$0xff]
    %v121 = vld [vmem:[%s3 + $0x18] sm:$0xff]
    %v122 = vld [vmem:[%s2] sm:$0xff]
    %v123 = vld [vmem:[%s4] sm:$0xff]
    %v124 = vld [vmem:[%s4 + $0x8] sm:$0xff]
    %vm125 = vcmask 130048
    %v127 = vsel %vm125, %v122, 0
    %129 = vmatprep.subr.mxu0 0.0
    %130 = vmatpush1.msra.mxu0 0.0
    %131 = vmatprep.subr.mxu0 0.0
    %132 = vmatpush1.msra.mxu0 0.0
    %133 = vmatprep.subr.mxu0 0.0
    %134 = vmatpush1.msra.mxu0 0.0
    %135 = vmatprep.subr.mxu0 0.0
    %136 = vmatpush1.msra.mxu0 0.0
    %137 = vmatprep.subr.mxu0 0.0
    %138 = vmatpush1.msra.mxu0 0.0
    %139 = vmatprep.subr.mxu0 0.0
    %140 = vmatpush1.msra.mxu0 0.0
    %141 = vmatprep.subr.mxu0 0.0
    %142 = vmatpush1.msra.mxu0 0.0
    %143 = vmatprep.subr.mxu0 0.0
    %144 = vmatpush1.msra.mxu0 0.0
    %145 = vmatprep.subr.mxu0 0.0
    %146 = vmatpush1.msra.mxu0 0.0
    %147 = vmatprep.subr.mxu0 0.0
    %148 = vmatpush1.msra.mxu0 0.0
    %149 = vmatprep.subr.mxu0 0.0
    %150 = vmatpush1.msra.mxu0 0.0
    %151 = vmatprep.subr.mxu0 0.0
    %152 = vmatpush1.msra.mxu0 0.0
    %153 = vmatprep.subr.mxu0 0.0
    %154 = vmatpush1.msra.mxu0 0.0
    %155 = vmatprep.subr.mxu0 0.0
    %156 = vmatpush1.msra.mxu0 0.0
    %157 = vmatprep.subr.mxu0 0.0
    %158 = vmatpush1.msra.mxu0 %v124
    %159 = vmatprep.subr.mxu0 0.0
    %160 = vmatpush1.msra.mxu0 %v123
    %161 = vmatprep.subr.mxu0 0.0
    %162 = vmatpush2.msra.mxu0 0.0
    %163 = vmatprep.subr.mxu0 0.0
    %164 = vmatpush2.msra.mxu0 0.0
    %165 = vmatprep.subr.mxu0 0.0
    %166 = vmatpush2.msra.mxu0 0.0
    %167 = vmatprep.subr.mxu0 0.0
    %168 = vmatpush2.msra.mxu0 0.0
    %169 = vmatprep.subr.mxu0 0.0
    %170 = vmatpush2.msra.mxu0 0.0
    %171 = vmatprep.subr.mxu0 0.0
    %172 = vmatpush2.msra.mxu0 0.0
    %173 = vmatprep.subr.mxu0 0.0
    %174 = vmatpush2.msra.mxu0 0.0
    %175 = vmatprep.subr.mxu0 0.0
    %176 = vmatpush2.msra.mxu0 0.0
    %177 = vmatprep.subr.mxu0 0.0
    %178 = vmatpush2.msra.mxu0 0.0
    %179 = vmatprep.subr.mxu0 0.0
    %180 = vmatpush2.msra.mxu0 0.0
    %181 = vmatprep.subr.mxu0 0.0
    %182 = vmatpush2.msra.mxu0 0.0
    %183 = vmatprep.subr.mxu0 0.0
    %184 = vmatpush2.msra.mxu0 0.0
    %185 = vmatprep.subr.mxu0 0.0
    %186 = vmatpush2.msra.mxu0 0.0
    %187 = vmatprep.subr.mxu0 0.0
    %188 = vmatpush2.msra.mxu0 0.0
    %189 = vmatprep.subr.mxu0 0.0
    %190 = vmatpush2.msra.mxu0 0.0
    %191 = vmatprep.subr.mxu0 0.0
    %192 = vmatpush2.msra.mxu0 0.0
    %193 = vmatprep.mubr.f32.mxu0 0.0
    %194 = vmatmul.mubr.f32.gmra.mxu0 %v127
    %v195 = vpop.f32.mrf.mxu0
    %v196 = vadd.f32 0.0, %v195
    %v197 = vpop.f32.mrf.mxu0
    %198 = vdwg.mxu0
    %vm199 = vcmask 261120
    %v201 = vsel %vm199, %v115, 0
    %203 = vmatprep.subr.mxu0 0.0
    %204 = vmatpush1.msra.mxu0 0.0
    %205 = vmatprep.subr.mxu0 0.0
    %206 = vmatpush1.msra.mxu0 0.0
    %207 = vmatprep.subr.mxu0 0.0
    %208 = vmatpush1.msra.mxu0 0.0
    %209 = vmatprep.subr.mxu0 0.0
    %210 = vmatpush1.msra.mxu0 0.0
    %211 = vmatprep.subr.mxu0 0.0
    %212 = vmatpush1.msra.mxu0 0.0
    %213 = vmatprep.subr.mxu0 0.0
    %214 = vmatpush1.msra.mxu0 0.0
    %215 = vmatprep.subr.mxu0 0.0
    %216 = vmatpush1.msra.mxu0 0.0
    %217 = vmatprep.subr.mxu0 0.0
    %218 = vmatpush1.msra.mxu0 0.0
    %219 = vmatprep.subr.mxu0 0.0
    %220 = vmatpush1.msra.mxu0 0.0
    %221 = vmatprep.subr.mxu0 0.0
    %222 = vmatpush1.msra.mxu0 0.0
    %223 = vmatprep.subr.mxu0 0.0
    %224 = vmatpush1.msra.mxu0 0.0
    %225 = vmatprep.subr.mxu0 0.0
    %226 = vmatpush1.msra.mxu0 0.0
    %227 = vmatprep.subr.mxu0 0.0
    %228 = vmatpush1.msra.mxu0 %v121
    %229 = vmatprep.subr.mxu0 0.0
    %230 = vmatpush1.msra.mxu0 %v120
    %231 = vmatprep.subr.mxu0 0.0
    %232 = vmatpush1.msra.mxu0 %v119
    %233 = vmatprep.subr.mxu0 0.0
    %234 = vmatpush1.msra.mxu0 %v118
    %235 = vmatprep.subr.mxu0 0.0
    %236 = vmatpush2.msra.mxu0 0.0
    %237 = vmatprep.subr.mxu0 0.0
    %238 = vmatpush2.msra.mxu0 0.0
    %239 = vmatprep.subr.mxu0 0.0
    %240 = vmatpush2.msra.mxu0 0.0
    %241 = vmatprep.subr.mxu0 0.0
    %242 = vmatpush2.msra.mxu0 0.0
    %243 = vmatprep.subr.mxu0 0.0
    %244 = vmatpush2.msra.mxu0 0.0
    %245 = vmatprep.subr.mxu0 0.0
    %246 = vmatpush2.msra.mxu0 0.0
    %247 = vmatprep.subr.mxu0 0.0
    %248 = vmatpush2.msra.mxu0 0.0
    %249 = vmatprep.subr.mxu0 0.0
    %250 = vmatpush2.msra.mxu0 0.0
    %251 = vmatprep.subr.mxu0 0.0
    %252 = vmatpush2.msra.mxu0 0.0
    %253 = vmatprep.subr.mxu0 0.0
    %254 = vmatpush2.msra.mxu0 0.0
    %255 = vmatprep.subr.mxu0 0.0
    %256 = vmatpush2.msra.mxu0 0.0
    %257 = vmatprep.subr.mxu0 0.0
    %258 = vmatpush2.msra.mxu0 0.0
    %259 = vmatprep.subr.mxu0 0.0
    %260 = vmatpush2.msra.mxu0 0.0
    %261 = vmatprep.subr.mxu0 0.0
    %262 = vmatpush2.msra.mxu0 0.0
    %263 = vmatprep.subr.mxu0 0.0
    %264 = vmatpush2.msra.mxu0 0.0
    %265 = vmatprep.subr.mxu0 0.0
    %266 = vmatpush2.msra.mxu0 0.0
    %267 = vmatprep.mubr.f32.mxu0 0.0
    %268 = vmatmul.mubr.f32.gmra.mxu0 %v201
    %v269 = vpop.f32.mrf.mxu0
    %v270 = vadd.f32 %v196, %v269
    %v271 = vpop.f32.mrf.mxu0
    %272 = vdwg.mxu0
    %273 = vst.msk [vmem:[#allocation2] sm:$0xff] %vm199, %v270
    // Predicated region
    $region22: #{tsptw_rie_context.1} parent=1 // pred_check
      _
    $region23: #{tsptw_rie_context.1} parent=1 // pred_check_branch
      %275 = sbr.rel (0) target = $region25
    $region24: #{tsptw_rie_context.1} parent=1 // pred_region
      %s277 = ssub.s32 128, 128
      %278 = vsyncadd [#allocation3], %s277
      %s280 = sshll.u32 [#allocation2], 4
      %s281 = int_to_ptr.vmem [resolvable:$true] %s280
      %283 = dma.vmem_to_hbm [thread:$0]  %s281, 128, %s5, [#allocation3]
    $region25: #{tsptw_rie_context.1} parent=1 // pred_fallthru
      _
    // Predicated region
    $region26: #{tsptw_rie_context.1} parent=1 // pred_check
      _
    $region27: #{tsptw_rie_context.1} parent=1 // pred_check_branch
      %285 = sbr.rel (0) target = $region29
    $region28: #{tsptw_rie_context.1} parent=1 // pred_region
      %286 = dma.done [#allocation3], 128
    $region29: #{tsptw_rie_context.1} parent=1 // pred_fallthru
      _
    %287 = vsyncpa [#allocation3], 1

</llo_original>
